<compile_context>
chip_gen: v6e
topology: v6e:2x2x1
jax: 0.10.0
libtpu: 0.0.40
codegen_flags: <defaults>
</compile_context>

<pallas_src>
import math
from typing import Dict, List, Optional, Tuple

import jax
import jax.numpy as jnp
import numpy as np
from jax.experimental import pallas as pl
from jax.experimental.pallas import tpu as pltpu

_ALIGN = 16                       # bf16 (16,128) tiling: keeps band starts tile-aligned
_TH_CANDIDATES = (512, 256, 128, 64, 32)


# ---------------------------------------------------------------------------
# Host-side bilinear bookkeeping (numpy, one-time per forward call)
# ---------------------------------------------------------------------------
def _interp_weights(in_size: int, out_size: int, scale: float):
    """lo/hi indices + frac for bilinear, align_corners=False, scale_factor path.

    Matches torch.nn.functional.interpolate(scale_factor=s):
        src = (dst + 0.5) / s - 0.5, clamped to [0, in_size - 1].
    """
    dst = np.arange(out_size, dtype=np.float64)
    src = (dst + 0.5) / float(scale) - 0.5
    src = np.clip(src, 0.0, float(in_size - 1))
    lo = np.clip(np.floor(src).astype(np.int64), 0, in_size - 1)
    hi = np.clip(lo + 1, 0, in_size - 1)
    frac = (src - lo).astype(np.float32)
    return lo, hi, frac


def _band_need(h_tables, th: int, pad_h: int, align: int) -> int:
    """Max #input rows any (image, H-tile) needs from a 16-aligned band start."""
    need = align
    for (lo, hi, _), h_out in h_tables:
        for i in range(pad_h // th):
            o0 = i * th
            if o0 >= h_out:
                continue
            o1 = min((i + 1) * th, h_out) - 1
            start = (int(lo[o0]) // align) * align
            need = max(need, int(hi[o1]) - start + 1)
    return int(math.ceil(need / align) * align)


def _band_starts(lo, h_out, th, n_tiles, band, hin_pad, align):
    """16-aligned input-row offset of the band used by each H-tile."""
    starts = np.zeros((n_tiles,), np.int32)
    max_start = max(hin_pad - band, 0)
    for i in range(n_tiles):
        o0 = i * th
        if o0 >= h_out:              # pure-padding tile: band content is irrelevant
            continue
        starts[i] = min((int(lo[o0]) // align) * align, max_start)
    return starts


def _banded_h_matrix(lo, hi, frac, starts, th, pad_h, band):
    """(pad_h, band) bf16: banded H interpolation rows; zero rows for H padding."""
    h_out = lo.shape[0]
    m = np.zeros((pad_h, band), np.float32)
    rows = np.arange(h_out)
    s = starts[rows // th].astype(np.int64)
    np.add.at(m, (rows, lo - s), 1.0 - frac)
    np.add.at(m, (rows, hi - s), frac)
    return jnp.asarray(m).astype(jnp.bfloat16)


def _w_matrix(lo, hi, frac, win_pad, pad_w):
    """(win_pad, pad_w) bf16: transposed W interpolation; zero cols for W padding."""
    w_out = lo.shape[0]
    m = np.zeros((win_pad, pad_w), np.float32)
    cols = np.arange(w_out)
    np.add.at(m, (lo, cols), 1.0 - frac)
    np.add.at(m, (hi, cols), frac)
    return jnp.asarray(m).astype(jnp.bfloat16)


def _vmem_budget_bytes() -> int:
    """Per-generation VMEM budget (v5e/v6e: 128 MiB, v7x: 64 MiB physical)."""
    cap = 64 * 1024 * 1024
    try:  # trace/compile-time hardware query; fall back if unavailable
        info = pltpu.get_tpu_info()
        cap = int(getattr(info, "vmem_capacity_bytes", cap))
    except Exception:
        pass
    return min(int(cap * 0.75), 96 * 1024 * 1024)


def _choose_tile_h(pad_h, c, hin_pad, win_pad, pad_w, h_tables, budget,
                   out_bytes, align):
    """Largest Hout tile (divisor of pad_h) + its band height fitting the budget."""
    last = None
    for th in _TH_CANDIDATES:
        if pad_h % th:
            continue
        band = min(_band_need(h_tables, th, pad_h, align), hin_pad)
        last = (th, band)
        # Double-buffered blocks (Pallas default), plus in-kernel intermediates.
        resident = 2 * (c * hin_pad * win_pad * 2       # image (bf16), const per image
                        + win_pad * pad_w * 2)          # Ww     (bf16), const per image
        per_step = 2 * (th * band * 2                   # Wh tile (bf16)
                        + c * th * pad_w * out_bytes    # out tile
                        + th * 4 + pad_w * 4)           # row_live / col_live
        interm = (band * win_pad * 2                    # band slab
                  + th * win_pad * (4 + 2)              # t (f32) + t (bf16)
                  + 2 * th * pad_w * 4)                 # y + live (f32)
        if resident + per_step + interm <= budget:
            return th, band
    return last                                         # pad_h % 32 == 0 always


def _resize_boxes(boxes, original_size: Tuple[int, int], new_size: Tuple[int, int]):
    """Plain JAX: 4 multiplies per box -- a kernel would be pure dispatch overhead."""
    h_ratio = float(new_size[0]) / float(original_size[0])
    w_ratio = float(new_size[1]) / float(original_size[1])
    ratio = jnp.array([w_ratio, h_ratio, w_ratio, h_ratio], jnp.float32)
    return boxes.astype(jnp.float32) * ratio


# ---------------------------------------------------------------------------
# Module-equivalent wrapper
# ---------------------------------------------------------------------------
class GeneralizedRCNNTransform:
    def __init__(self, min_size, max_size, image_mean: List[float],
                 image_std: List[float], out_dtype=jnp.float32):
        if not isinstance(min_size, (list, tuple)):
            min_size = (min_size,)
        self.min_size = min_size
        self.max_size = max_size
        self.image_mean = jnp.asarray(image_mean, jnp.float32)
        self.image_std = jnp.asarray(image_std, jnp.float32)
        self.out_dtype = out_dtype      # f32 = torch semantics; bf16 halves writeback
        self.training = False           # eval semantics (deterministic)
        self._vmem_budget = _vmem_budget_bytes()

    # --- resize bookkeeping (matches torchvision eval path) -----------------
    def _resize_params(self, h: int, w: int):
        size = float(self.min_size[-1])
        min_s, max_s = float(min(h, w)), float(max(h, w))
        scale = size / min_s
        if max_s * scale > self.max_size:
            scale = self.max_size / max_s
        return scale, int(math.floor(h * scale)), int(math.floor(w * scale))

    # --- the single batched pallas_call --------------------------------------
    def _pallas_batch(self, inv_std, neg_ms, band_tbl, img_all, wh_all,
                      rl_all, cl_all, ww_all, pad_h, pad_w, th):
        n, c, hin_pad, win_pad = (int(s) for s in img_all.shape)
        band = int(wh_all.shape[-1])
        n_tiles = pad_h // th
        banded = band < hin_pad        # static: whole input fits the band otherwise

        def kernel(inv_std_ref, neg_ms_ref, band_ref, img_ref, wh_ref,
                   rl_ref, cl_ref, ww_ref, out_ref):
            wh = wh_ref[...]                               # (th, band)       bf16
            ww = ww_ref[...]                               # (win_pad, pad_w) bf16
            # Precomputed live mask: interp rows/cols sum to ~1 in the live region,
            # exactly 0 in padding -> folded normalization & exact zero padding.
            live = rl_ref[...] * cl_ref[...]               # (th,1)*(1,pad_w)  f32

            if banded:
                b, i = pl.program_id(0), pl.program_id(1)
                bs = pl.multiple_of(band_ref[b * n_tiles + i], _ALIGN)

            for ch in range(c):                            # static, tiny channel loop
                if banded:
                    x = img_ref[ch, pl.ds(bs, band), :]    # (band, win_pad)  bf16
                else:
                    x = img_ref[ch]                        # band == hin_pad
                t = jnp.dot(wh, x, preferred_element_type=jnp.float32)
                y = jnp.dot(t.astype(jnp.bfloat16), ww,
                            preferred_element_type=jnp.float32)   # (th, pad_w)
                # Folded normalization, f32 epilogue, one lane-dense store/channel.
                out_ref[ch] = (y * inv_std_ref[ch]
                               + neg_ms_ref[ch] * live).astype(out_ref.dtype)

        return pl.pallas_call(
            kernel,
            out_shape=jax.ShapeDtypeStruct((n, c, pad_h, pad_w), self.out_dtype),
            grid=(n, n_tiles),
            in_specs=[
                pl.BlockSpec(memory_space=pltpu.MemorySpace.SMEM),   # inv_std (C,)
                pl.BlockSpec(memory_space=pltpu.MemorySpace.SMEM),   # -mean/std (C,)
                pl.BlockSpec(memory_space=pltpu.MemorySpace.SMEM),   # band starts
                pl.BlockSpec((None, c, hin_pad, win_pad), lambda b, i: (b, 0, 0, 0)),
                pl.BlockSpec((None, th, band), lambda b, i: (b, i, 0)),
                pl.BlockSpec((None, th, 1), lambda b, i: (b, i, 0)),
                pl.BlockSpec((None, 1, pad_w), lambda b, i: (b, 0, 0)),
                pl.BlockSpec((None, win_pad, pad_w), lambda b, i: (b, 0, 0)),
            ],
            out_specs=pl.BlockSpec((None, c, th, pad_w), lambda b, i: (b, 0, i, 0)),
            compiler_params=pltpu.CompilerParams(
                # Only the batch axis is parallel: on v7x the two TCs split by image,
                # so neither core duplicates the resident image / Ww DMA.
                dimension_semantics=("parallel", "arbitrary"),
                vmem_limit_bytes=int(self._vmem_budget)),
        )(inv_std, neg_ms, band_tbl, img_all, wh_all, rl_all, cl_all, ww_all)

    # --- forward --------------------------------------------------------------
    def forward(self, images: List[jnp.ndarray],
                targets: Optional[List[Dict[str, jnp.ndarray]]] = None):
        size_divisible = 32
        c = int(images[0].shape[0])
        infos = []
        for img in images:
            assert img.ndim == 3, "expected [C, H, W] images"
            assert int(img.shape[0]) == c, "all images must share the channel count"
            h, w = int(img.shape[-2]), int(img.shape[-1])
            scale, h_out, w_out = self._resize_params(h, w)
            infos.append((h, w, scale, h_out, w_out))

        pad_h = int(math.ceil(max(i[3] for i in infos) / size_divisible) * size_divisible)
        pad_w = int(math.ceil(max(i[4] for i in infos) / size_divisible) * size_divisible)
        hin_pad = int(math.ceil(max(i[0] for i in infos) / _ALIGN) * _ALIGN)
        win_pad = max(i[1] for i in infos)

        # Per-image interpolation tables (numpy, one-time).
        h_tabs = [_interp_weights(h, h_out, s) for (h, _, s, h_out, _) in infos]
        w_tabs = [_interp_weights(w, w_out, s) for (_, w, s, _, w_out) in infos]
        h_tables = [(tab, info[3]) for tab, info in zip(h_tabs, infos)]

        out_bytes = int(np.dtype(self.out_dtype).itemsize)
        th, band = _choose_tile_h(pad_h, c, hin_pad, win_pad, pad_w, h_tables,
                                  self._vmem_budget, out_bytes, _ALIGN)
        n_tiles = pad_h // th

        imgs, whs, wws, rls, cls, starts_all = [], [], [], [], [], []
        for img, info, (lo_h, hi_h, fr_h), (lo_w, hi_w, fr_w) in zip(
                images, infos, h_tabs, w_tabs):
            h, w, _, h_out, _ = info
            # Zero host padding to the group max: zero Wh cols / Ww rows keep it exact.
            imgs.append(jnp.pad(img.astype(jnp.bfloat16),
                                ((0, 0), (0, hin_pad - h), (0, win_pad - w))))
            starts = _band_starts(lo_h, h_out, th, n_tiles, band, hin_pad, _ALIGN)
            wh = _banded_h_matrix(lo_h, hi_h, fr_h, starts, th, pad_h, band)
            ww = _w_matrix(lo_w, hi_w, fr_w, win_pad, pad_w)
            whs.append(wh)
            wws.append(ww)
            starts_all.append(starts)
            # Live-mask factors from the SAME bf16 matrices the MXU sees, so the
            # folded normalization stays exact and padding comes out exactly 0.
            rls.append(jnp.sum(wh.astype(jnp.float32), axis=1, keepdims=True))
            cls.append(jnp.sum(ww.astype(jnp.float32), axis=0, keepdims=True))

        inv_std = (1.0 / self.image_std).astype(jnp.float32)
        neg_ms = (-self.image_mean / self.image_std).astype(jnp.float32)
        band_tbl = jnp.asarray(np.concatenate(starts_all), jnp.int32)   # (N*T,)

        batched = self._pallas_batch(
            inv_std, neg_ms, band_tbl, jnp.stack(imgs), jnp.stack(whs),
            jnp.stack(rls), jnp.stack(cls), jnp.stack(wws), pad_h, pad_w, th)

        image_sizes = [(i[3], i[4]) for i in infos]

        new_targets = list(targets) if targets is not None else None
        if new_targets is not None:
            for idx, (h, w, _, h_out, w_out) in enumerate(infos):
                if new_targets[idx] is None:
                    continue
                new_targets[idx] = dict(new_targets[idx])
                new_targets[idx]["boxes"] = _resize_boxes(
                    new_targets[idx]["boxes"], (h, w), (h_out, w_out))

        # ImageList(tensors, image_sizes) returned as a plain tuple.
        return (batched, image_sizes), new_targets

    # --- eval-mode post_process (plain JAX: 4 multiplies per box) -------------
    def post_process(self, result, image_sizes, original_sizes):
        if self.training:
            return result
        out = []
        for pred, resized, original in zip(result, image_sizes, original_sizes):
            out.append(_resize_boxes(pred["boxes"], resized, original))
        return out


# ---------------------------------------------------------------------------
# Pure-JAX f32 reference (numeric verification only)
# ---------------------------------------------------------------------------
def _full_matrix(lo, hi, frac, out_size, in_size):
    m = np.zeros((out_size, in_size), np.float32)
    r = np.arange(out_size)
    np.add.at(m, (r, lo), 1.0 - frac)
    np.add.at(m, (r, hi), frac)
    return jnp.asarray(m)


def _reference_batch(images, mean, std, transform, pad_h, pad_w):
    outs = []
    for img in images:
        h, w = int(img.shape[-2]), int(img.shape[-1])
        scale, h_out, w_out = transform._resize_params(h, w)
        x = (img.astype(jnp.float32) - mean[:, None, None]) / std[:, None, None]
        wh = _full_matrix(*_interp_weights(h, h_out, scale), h_out, h)
        ww = _full_matrix(*_interp_weights(w, w_out, scale), w_out, w)
        y = jnp.einsum("oh,chw,pw->cop", wh, x, ww)
        canvas = jnp.zeros((img.shape[0], pad_h, pad_w), jnp.float32)
        canvas = canvas.at[:, :h_out, :w_out].set(y)
        outs.append(canvas)
    return jnp.stack(outs, 0)


# ---------------------------------------------------------------------------
if __name__ == "__main__":
    key = jax.random.PRNGKey(0)
    k1, k2, k3, k4, k5, k6 = jax.random.split(key, 6)

    mean = [0.485, 0.456, 0.406]
    std = [0.229, 0.224, 0.225]
    mean_j = jnp.asarray(mean, jnp.float32)
    std_j = jnp.asarray(std, jnp.float32)

    # ---- Case 1: same-shape images -> single batched call -------------------
    transform = GeneralizedRCNNTransform(min_size=24, max_size=48,
                                         image_mean=mean, image_std=std)
    img_a = jax.random.uniform(k1, (3, 16, 16), jnp.float32)
    img_b = jax.random.uniform(k2, (3, 16, 16), jnp.float32)
    boxes_a = jax.random.uniform(k3, (8, 4), jnp.float32) * 16.0
    boxes_b = jax.random.uniform(k4, (8, 4), jnp.float32) * 16.0
    targets = [{"boxes": boxes_a}, {"boxes": boxes_b}]

    (batched, image_sizes), out_targets = transform.forward([img_a, img_b], targets)
    jax.block_until_ready(batched)

    assert batched.shape == (2, 3, 32, 32), batched.shape
    assert image_sizes == [(24, 24), (24, 24)], image_sizes
    assert out_targets[0]["boxes"].shape == (8, 4)

    ref = _reference_batch([img_a, img_b], mean_j, std_j, transform, 32, 32)
    err = float(jnp.max(jnp.abs(batched.astype(jnp.float32) - ref)))
    assert err < 0.2, f"case1 max abs error vs f32 reference: {err}"

    exp_boxes = boxes_a * jnp.array([1.5, 1.5, 1.5, 1.5], jnp.float32)
    assert bool(jnp.allclose(out_targets[0]["boxes"], exp_boxes, rtol=1e-5))

    # ---- Case 2: mixed-shape images -> STILL one batched call ---------------
    img_c = jax.random.uniform(k5, (3, 16, 20), jnp.float32)
    (batched2, sizes2), _ = transform.forward([img_a, img_c], None)
    jax.block_until_ready(batched2)

    assert batched2.shape == (2, 3, 32, 32), batched2.shape
    assert sizes2 == [(24, 24), (24, 30)], sizes2
    # padded margins must be exactly zero
    assert float(jnp.max(jnp.abs(batched2[1, :, 24:, :]))) == 0.0
    assert float(jnp.max(jnp.abs(batched2[1, :, :, 30:]))) == 0.0
    ref2 = _reference_batch([img_a, img_c], mean_j, std_j, transform, 32, 32)
    err2 = float(jnp.max(jnp.abs(batched2.astype(jnp.float32) - ref2)))
    assert err2 < 0.2, f"case2 max abs error vs f32 reference: {err2}"

    # ---- Case 3: multi-H-tile output -> exercises the banded first matmul,
    #      the SMEM band-start table, and the bf16 output path -----------------
    transform3 = GeneralizedRCNNTransform(min_size=96, max_size=192,
                                          image_mean=mean, image_std=std,
                                          out_dtype=jnp.bfloat16)
    img_d = jax.random.uniform(k6, (3, 96, 96), jnp.float32)
    (batched3, sizes3), _ = transform3.forward([img_d], None)
    jax.block_until_ready(batched3)

    assert batched3.shape == (1, 3, 96, 96), batched3.shape
    assert sizes3 == [(96, 96)], sizes3
    assert batched3.dtype == jnp.bfloat16
    ref3 = _reference_batch([img_d], mean_j, std_j, transform3, 96, 96)
    err3 = float(jnp.max(jnp.abs(batched3.astype(jnp.float32) - ref3)))
    assert err3 < 0.25, f"case3 max abs error vs f32 reference: {err3}"

    print("KERNEL_OK")
</pallas_src>

<mosaic_0001>
module attributes {stable_mosaic.version = 11 : i64} {
  func.func @kernel(%arg0: i32, %arg1: i32, %arg2: memref<3xf32, #tpu.memory_space<smem>>, %arg3: memref<3xf32, #tpu.memory_space<smem>>, %arg4: memref<2xi32, #tpu.memory_space<smem>>, %arg5: memref<1x3x16x16xbf16, #tpu.memory_space<vmem>>, %arg6: memref<1x32x16xbf16, #tpu.memory_space<vmem>>, %arg7: memref<1x32x1xf32, #tpu.memory_space<vmem>>, %arg8: memref<1x1x32xf32, #tpu.memory_space<vmem>>, %arg9: memref<1x16x32xbf16, #tpu.memory_space<vmem>>, %arg10: memref<1x3x32x32xf32, #tpu.memory_space<vmem>>) attributes {dimension_semantics = [#tpu.dimension_semantics<parallel>, #tpu.dimension_semantics<arbitrary>], iteration_bounds = array<i64: 2, 1>, scalar_prefetch = 0 : i64, scratch_operands = 0 : i64, tpu.core_type = #tpu.core_type<tc>, window_params = [{transform_indices = @transform_0, window_bounds = array<i64: 3>}, {transform_indices = @transform_1, window_bounds = array<i64: 3>}, {transform_indices = @transform_2, window_bounds = array<i64: 2>}, {transform_indices = @transform_3, window_bounds = array<i64: 1, 3, 16, 16>}, {transform_indices = @transform_4, window_bounds = array<i64: 1, 32, 16>}, {transform_indices = @transform_5, window_bounds = array<i64: 1, 32, 1>}, {transform_indices = @transform_6, window_bounds = array<i64: 1, 1, 32>}, {transform_indices = @transform_7, window_bounds = array<i64: 1, 16, 32>}, {transform_indices = @transform_8, window_bounds = array<i64: 1, 3, 32, 32>}]} {
    %c0 = arith.constant 0 : index
    %c0_0 = arith.constant 0 : index
    %c0_1 = arith.constant 0 : index
    %0 = vector.load %arg6[%c0, %c0_0, %c0_1] : memref<1x32x16xbf16, #tpu.memory_space<vmem>>, vector<1x32x16xbf16>
    %1 = vector.shape_cast %0 : vector<1x32x16xbf16> to vector<32x16xbf16>
    %c0_2 = arith.constant 0 : index
    %c0_3 = arith.constant 0 : index
    %c0_4 = arith.constant 0 : index
    %2 = vector.load %arg9[%c0_2, %c0_3, %c0_4] : memref<1x16x32xbf16, #tpu.memory_space<vmem>>, vector<1x16x32xbf16>
    %3 = vector.shape_cast %2 : vector<1x16x32xbf16> to vector<16x32xbf16>
    %c0_5 = arith.constant 0 : index
    %c0_6 = arith.constant 0 : index
    %c0_7 = arith.constant 0 : index
    %4 = vector.load %arg7[%c0_5, %c0_6, %c0_7] : memref<1x32x1xf32, #tpu.memory_space<vmem>>, vector<1x32x1xf32>
    %5 = vector.shape_cast %4 : vector<1x32x1xf32> to vector<32x1xf32>
    %c0_8 = arith.constant 0 : index
    %c0_9 = arith.constant 0 : index
    %c0_10 = arith.constant 0 : index
    %6 = vector.load %arg8[%c0_8, %c0_9, %c0_10] : memref<1x1x32xf32, #tpu.memory_space<vmem>>, vector<1x1x32xf32>
    %7 = vector.shape_cast %6 : vector<1x1x32xf32> to vector<1x32xf32>
    %8 = vector.broadcast %5 : vector<32x1xf32> to vector<32x32xf32>
    %9 = vector.broadcast %7 : vector<1x32xf32> to vector<32x32xf32>
    %10 = arith.mulf %8, %9 : vector<32x32xf32>
    %c0_11 = arith.constant 0 : index
    %c0_12 = arith.constant 0 : index
    %c0_13 = arith.constant 0 : index
    %c0_14 = arith.constant 0 : index
    %11 = vector.load %arg5[%c0_11, %c0_12, %c0_13, %c0_14] : memref<1x3x16x16xbf16, #tpu.memory_space<vmem>>, vector<1x1x16x16xbf16>
    %12 = vector.shape_cast %11 : vector<1x1x16x16xbf16> to vector<16x16xbf16>
    %cst = arith.constant dense<0.000000e+00> : vector<32x16xf32>
    %13 = tpu.matmul %1, %12, %cst {dimension_numbers = #tpu.dot_dimension_numbers<[1], [0], [0], [1], [0, 0, 1, 1], [], []>} : vector<32x16xbf16>, vector<16x16xbf16>, vector<32x16xf32> -> vector<32x16xf32>
    %14 = arith.truncf %13 : vector<32x16xf32> to vector<32x16xbf16>
    %cst_15 = arith.constant dense<0.000000e+00> : vector<32x32xf32>
    %15 = tpu.matmul %14, %3, %cst_15 {dimension_numbers = #tpu.dot_dimension_numbers<[1], [0], [0], [1], [0, 0, 1, 1], [], []>} : vector<32x16xbf16>, vector<16x32xbf16>, vector<32x32xf32> -> vector<32x32xf32>
    %c0_16 = arith.constant 0 : index
    %16 = memref.load %arg2[%c0_16] : memref<3xf32, #tpu.memory_space<smem>>
    %17 = vector.broadcast %16 : f32 to vector<32x32xf32>
    %18 = arith.mulf %15, %17 : vector<32x32xf32>
    %c0_17 = arith.constant 0 : index
    %19 = memref.load %arg3[%c0_17] : memref<3xf32, #tpu.memory_space<smem>>
    %20 = vector.broadcast %19 : f32 to vector<32x32xf32>
    %21 = arith.mulf %20, %10 : vector<32x32xf32>
    %22 = arith.addf %18, %21 : vector<32x32xf32>
    %c0_18 = arith.constant 0 : index
    %c0_19 = arith.constant 0 : index
    %c0_20 = arith.constant 0 : index
    %c0_21 = arith.constant 0 : index
    %23 = vector.load %arg10[%c0_18, %c0_19, %c0_20, %c0_21] : memref<1x3x32x32xf32, #tpu.memory_space<vmem>>, vector<1x1x32x32xf32>
    %24 = vector.shape_cast %23 : vector<1x1x32x32xf32> to vector<32x32xf32>
    %25 = vector.shape_cast %22 : vector<32x32xf32> to vector<1x1x32x32xf32>
    tpu.vector_store %arg10[%c0_18, %c0_19, %c0_20, %c0_21], %25 {strides = array<i32>} : memref<1x3x32x32xf32, #tpu.memory_space<vmem>>, vector<1x1x32x32xf32>,
    %c0_22 = arith.constant 0 : index
    %c1 = arith.constant 1 : index
    %c0_23 = arith.constant 0 : index
    %c0_24 = arith.constant 0 : index
    %26 = vector.load %arg5[%c0_22, %c1, %c0_23, %c0_24] : memref<1x3x16x16xbf16, #tpu.memory_space<vmem>>, vector<1x1x16x16xbf16>
    %27 = vector.shape_cast %26 : vector<1x1x16x16xbf16> to vector<16x16xbf16>
    %cst_25 = arith.constant dense<0.000000e+00> : vector<32x16xf32>
    %28 = tpu.matmul %1, %27, %cst_25 {dimension_numbers = #tpu.dot_dimension_numbers<[1], [0], [0], [1], [0, 0, 1, 1], [], []>} : vector<32x16xbf16>, vector<16x16xbf16>, vector<32x16xf32> -> vector<32x16xf32>
    %29 = arith.truncf %28 : vector<32x16xf32> to vector<32x16xbf16>
    %cst_26 = arith.constant dense<0.000000e+00> : vector<32x32xf32>
    %30 = tpu.matmul %29, %3, %cst_26 {dimension_numbers = #tpu.dot_dimension_numbers<[1], [0], [0], [1], [0, 0, 1, 1], [], []>} : vector<32x16xbf16>, vector<16x32xbf16>, vector<32x32xf32> -> vector<32x32xf32>
    %c1_27 = arith.constant 1 : index
    %31 = memref.load %arg2[%c1_27] : memref<3xf32, #tpu.memory_space<smem>>
    %32 = vector.broadcast %31 : f32 to vector<32x32xf32>
    %33 = arith.mulf %30, %32 : vector<32x32xf32>
    %c1_28 = arith.constant 1 : index
    %34 = memref.load %arg3[%c1_28] : memref<3xf32, #tpu.memory_space<smem>>
    %35 = vector.broadcast %34 : f32 to vector<32x32xf32>
    %36 = arith.mulf %35, %10 : vector<32x32xf32>
    %37 = arith.addf %33, %36 : vector<32x32xf32>
    %c0_29 = arith.constant 0 : index
    %c1_30 = arith.constant 1 : index
    %c0_31 = arith.constant 0 : index
    %c0_32 = arith.constant 0 : index
    %38 = vector.load %arg10[%c0_29, %c1_30, %c0_31, %c0_32] : memref<1x3x32x32xf32, #tpu.memory_space<vmem>>, vector<1x1x32x32xf32>
    %39 = vector.shape_cast %38 : vector<1x1x32x32xf32> to vector<32x32xf32>
    %40 = vector.shape_cast %37 : vector<32x32xf32> to vector<1x1x32x32xf32>
    tpu.vector_store %arg10[%c0_29, %c1_30, %c0_31, %c0_32], %40 {strides = array<i32>} : memref<1x3x32x32xf32, #tpu.memory_space<vmem>>, vector<1x1x32x32xf32>,
    %c0_33 = arith.constant 0 : index
    %c2 = arith.constant 2 : index
    %c0_34 = arith.constant 0 : index
    %c0_35 = arith.constant 0 : index
    %41 = vector.load %arg5[%c0_33, %c2, %c0_34, %c0_35] : memref<1x3x16x16xbf16, #tpu.memory_space<vmem>>, vector<1x1x16x16xbf16>
    %42 = vector.shape_cast %41 : vector<1x1x16x16xbf16> to vector<16x16xbf16>
    %cst_36 = arith.constant dense<0.000000e+00> : vector<32x16xf32>
    %43 = tpu.matmul %1, %42, %cst_36 {dimension_numbers = #tpu.dot_dimension_numbers<[1], [0], [0], [1], [0, 0, 1, 1], [], []>} : vector<32x16xbf16>, vector<16x16xbf16>, vector<32x16xf32> -> vector<32x16xf32>
    %44 = arith.truncf %43 : vector<32x16xf32> to vector<32x16xbf16>
    %cst_37 = arith.constant dense<0.000000e+00> : vector<32x32xf32>
    %45 = tpu.matmul %44, %3, %cst_37 {dimension_numbers = #tpu.dot_dimension_numbers<[1], [0], [0], [1], [0, 0, 1, 1], [], []>} : vector<32x16xbf16>, vector<16x32xbf16>, vector<32x32xf32> -> vector<32x32xf32>
    %c2_38 = arith.constant 2 : index
    %46 = memref.load %arg2[%c2_38] : memref<3xf32, #tpu.memory_space<smem>>
    %47 = vector.broadcast %46 : f32 to vector<32x32xf32>
    %48 = arith.mulf %45, %47 : vector<32x32xf32>
    %c2_39 = arith.constant 2 : index
    %49 = memref.load %arg3[%c2_39] : memref<3xf32, #tpu.memory_space<smem>>
    %50 = vector.broadcast %49 : f32 to vector<32x32xf32>
    %51 = arith.mulf %50, %10 : vector<32x32xf32>
    %52 = arith.addf %48, %51 : vector<32x32xf32>
    %c0_40 = arith.constant 0 : index
    %c2_41 = arith.constant 2 : index
    %c0_42 = arith.constant 0 : index
    %c0_43 = arith.constant 0 : index
    %53 = vector.load %arg10[%c0_40, %c2_41, %c0_42, %c0_43] : memref<1x3x32x32xf32, #tpu.memory_space<vmem>>, vector<1x1x32x32xf32>
    %54 = vector.shape_cast %53 : vector<1x1x32x32xf32> to vector<32x32xf32>
    %55 = vector.shape_cast %52 : vector<32x32xf32> to vector<1x1x32x32xf32>
    tpu.vector_store %arg10[%c0_40, %c2_41, %c0_42, %c0_43], %55 {strides = array<i32>} : memref<1x3x32x32xf32, #tpu.memory_space<vmem>>, vector<1x1x32x32xf32>,
    return
  }
  func.func @transform_0(%arg0: i32, %arg1: i32) -> i32 {
    %c0_i32 = arith.constant 0 : i32
    %c0_i32_0 = arith.constant 0 : i32
    return %c0_i32 : i32
  }
  func.func @transform_1(%arg0: i32, %arg1: i32) -> i32 {
    %c0_i32 = arith.constant 0 : i32
    %c0_i32_0 = arith.constant 0 : i32
    return %c0_i32 : i32
  }
  func.func @transform_2(%arg0: i32, %arg1: i32) -> i32 {
    %c0_i32 = arith.constant 0 : i32
    %c0_i32_0 = arith.constant 0 : i32
    return %c0_i32 : i32
  }
  func.func @transform_3(%arg0: i32, %arg1: i32) -> (i32, i32, i32, i32) {
    %c0_i32 = arith.constant 0 : i32
    %c0_i32_0 = arith.constant 0 : i32
    %c0_i32_1 = arith.constant 0 : i32
    %c0_i32_2 = arith.constant 0 : i32
    return %arg0, %c0_i32, %c0_i32_0, %c0_i32_1 : i32, i32, i32, i32
  }
  func.func @transform_4(%arg0: i32, %arg1: i32) -> (i32, i32, i32) {
    %c0_i32 = arith.constant 0 : i32
    %c0_i32_0 = arith.constant 0 : i32
    return %arg0, %arg1, %c0_i32 : i32, i32, i32
  }
  func.func @transform_5(%arg0: i32, %arg1: i32) -> (i32, i32, i32) {
    %c0_i32 = arith.constant 0 : i32
    %c0_i32_0 = arith.constant 0 : i32
    return %arg0, %arg1, %c0_i32 : i32, i32, i32
  }
  func.func @transform_6(%arg0: i32, %arg1: i32) -> (i32, i32, i32) {
    %c0_i32 = arith.constant 0 : i32
    %c0_i32_0 = arith.constant 0 : i32
    %c0_i32_1 = arith.constant 0 : i32
    return %arg0, %c0_i32, %c0_i32_0 : i32, i32, i32
  }
  func.func @transform_7(%arg0: i32, %arg1: i32) -> (i32, i32, i32) {
    %c0_i32 = arith.constant 0 : i32
    %c0_i32_0 = arith.constant 0 : i32
    %c0_i32_1 = arith.constant 0 : i32
    return %arg0, %c0_i32, %c0_i32_0 : i32, i32, i32
  }
  func.func @transform_8(%arg0: i32, %arg1: i32) -> (i32, i32, i32, i32) {
    %c0_i32 = arith.constant 0 : i32
    %c0_i32_0 = arith.constant 0 : i32
    %c0_i32_1 = arith.constant 0 : i32
    return %arg0, %c0_i32, %arg1, %c0_i32_0 : i32, i32, i32, i32
  }
}

</mosaic_0001>

<llo_original>
// kernel: tpu_custom_call.1
$region0: #{tpu_custom_call.1}
  #allocation0 [shape = 'u32[]', space=smem, size = 0x4, offset = 0x4, fixed_abs, tag = 'smem constant byte address 0x4 - core index']
  #allocation1 [shape = 'u32[144,128]{1,0:T(1,128)}', space=vmem, size = 0x12000, scoped, tag = 'internal scratch']
  %s0 = inlined_call_operand.vmem [shape: f32[3], index: 0, kind: input, shape index: {}]
  %s1 = inlined_call_operand.vmem [shape: f32[3], index: 1, kind: input, shape index: {}]
  %s2 = inlined_call_operand.vmem [shape: s32[2], index: 2, kind: input, shape index: {}]
  %s3 = inlined_call_operand.vmem [shape: bf16[2,3,16,16], index: 3, kind: input, shape index: {}]
  %s4 = inlined_call_operand.vmem [shape: bf16[2,32,16], index: 4, kind: input, shape index: {}]
  %s5 = inlined_call_operand.vmem [shape: f32[2,32,1], index: 5, kind: input, shape index: {}]
  %s6 = inlined_call_operand.vmem [shape: f32[2,1,32], index: 6, kind: input, shape index: {}]
  %s7 = inlined_call_operand.vmem [shape: bf16[2,16,32], index: 7, kind: input, shape index: {}]
  %s8 = inlined_call_operand.hbm [shape: f32[2,3,32,32], index: 8, kind: output, shape index: {}]
  %s9 = sld [smem:[#allocation0]]
  $region77: #{tpu_custom_call.1} parent=0
    _
  %s11 = ssub.s32 1, %s9
  %s12 = scalar_select 0, %s11, %s9
  $region1: #{tpu_custom_call.1} parent=0
    #allocation2 [shape = 'u8[512]{0}', space=smem, size = 0x200, scoped, tag = 'input window, operand 0, single buffered']
    #allocation3 [shape = 's32[2]{0}', space=sflag, size = 0x8, scoped, tag = 'scoped memory for tpu_custom_call.1']
    #allocation4 [shape = 's32[2]{0}', space=sflag, size = 0x8, scoped, tag = 'scoped memory for tpu_custom_call.1']
    #allocation5 [shape = 'u8[512]{0}', space=smem, size = 0x200, scoped, tag = 'input window, operand 1, single buffered']
    #allocation6 [shape = 's32[1]{0}', space=sflag, size = 0x4, scoped, tag = 'scoped memory for tpu_custom_call.1']
    #allocation7 [shape = 'u8[512]{0}', space=smem, size = 0x200, scoped, tag = 'input window, operand 2, single buffered']
    #allocation8 [shape = 'u8[98304]{0}', space=vmem, size = 0x18000, scoped, tag = 'output window, operand 0']
    %13 = vsyncpa [#allocation4], 0
    %14 = vsyncpa [#allocation6], 0
    %15 = vsyncpa [#allocation3], 0
    %s16 = scalar_lea.sflag [#allocation3], 1
    %17 = vsyncpa %s16, 0
    loop: start=0, step=1, limit=4
    $region2: #{tpu_custom_call.1} parent=1 // loop_pre_header
      _
    $region3: #{tpu_custom_call.1} parent=1 // loop_header
      %s19 = sphi 0, %s23
      %p20 = scmp.ge.s32.totalorder %s19, 4
      %s26 = sphi 0, %s38
      %s27 = sphi 0, %s34
      %s28 = sphi 0, %s26
      %s29 = sphi 0, %s27
      %s30 = sphi 0, %s28
      %s31 = sphi 0, %s29
      %s39 = sphi 0, %s39
      %s41 = sphi 0, %s39
      %s42 = sphi 0, %s41
      %s56 = sphi 0, %s42
      %s60 = sphi 0, %s60
      %s62 = sphi 0, %s60
      %s63 = sphi 0, %s62
      %s77 = sphi 0, %s63
      %s81 = sphi 0, %s81
      %s83 = sphi 0, %s81
      %s84 = sphi 0, %s83
      %s98 = sphi 0, %s84
      %s104 = sphi 0, %s106
      %s107 = sphi 0, %s104
      %s108 = sphi 0, %s107
      %s124 = sphi 0, %s108
      %s132 = sphi 0, %s134
      %s135 = sphi 0, %s132
      %s136 = sphi 0, %s135
      %s152 = sphi 0, %s136
      %s160 = sphi 0, %s162
      %s163 = sphi 0, %s160
      %s164 = sphi 0, %s163
      %s180 = sphi 0, %s164
      %s186 = sphi 0, %s188
      %s189 = sphi 0, %s186
      %s190 = sphi 0, %s189
      %s206 = sphi 0, %s190
      %s212 = sphi 0, %s214
      %s215 = sphi 0, %s212
      %s216 = sphi 0, %s215
      %s232 = sphi 0, %s216
      %s240 = sphi 0, %s242
      %s243 = sphi 0, %s240
      %s244 = sphi 0, %s243
      %s260 = sphi 0, %s244
    $region4: #{tpu_custom_call.1} parent=1 // loop_header_branch
      %22 = sbr.rel (%p20) target = $region8
    $region5: #{tpu_custom_call.1} parent=1 // loop_body
      %s24 = ssub.s32 %s19, 1
      %s25 = ssub.s32 %s19, 2
      %s32 = sadd.s32 1, %s27
      %p33 = scmp.ge.s32.totalorder %s32, 1
      %s34 = scalar_select %p33, 0, %s32
      %s35 = sadd.s32 1, %s26
      %s36 = scalar_select %p33, %s35, %s26
      %p37 = scmp.ge.s32.totalorder %s36, 2
      %s38 = scalar_select %p37, 0, %s36
      %s40 = sadd.s32 %s39, 1
      %p43 = scmp.eq.s32.totalorder %s19, 1
      %p44 = scmp.ne.s32.totalorder %s39, %s41
      %p45 = scmp.eq.s32.totalorder %s19, 0
      %p46 = por %p44, %p45
      %p47 = scmp.ne.s32.totalorder %s39, %s41
      %p48 = scmp.eq.s32.totalorder %s24, 1
      %p49 = por %p47, %p48
      %p50 = scmp.ne.s32.totalorder %s41, %s42
      %p51 = scmp.eq.s32.totalorder %s24, 0
      %p52 = por %p50, %p51
      %p53 = scmp.ne.s32.totalorder %s41, %s42
      %p54 = scmp.eq.s32.totalorder %s25, 1
      %p55 = por %p53, %p54
      %p57 = scmp.ne.s32.totalorder %s42, %s56
      %p58 = scmp.eq.s32.totalorder %s25, 0
      %p59 = por %p57, %p58
      %s61 = sadd.s32 %s60, 1
      %p64 = scmp.eq.s32.totalorder %s19, 1
      %p65 = scmp.ne.s32.totalorder %s60, %s62
      %p66 = scmp.eq.s32.totalorder %s19, 0
      %p67 = por %p65, %p66
      %p68 = scmp.ne.s32.totalorder %s60, %s62
      %p69 = scmp.eq.s32.totalorder %s24, 1
      %p70 = por %p68, %p69
      %p71 = scmp.ne.s32.totalorder %s62, %s63
      %p72 = scmp.eq.s32.totalorder %s24, 0
      %p73 = por %p71, %p72
      %p74 = scmp.ne.s32.totalorder %s62, %s63
      %p75 = scmp.eq.s32.totalorder %s25, 1
      %p76 = por %p74, %p75
      %p78 = scmp.ne.s32.totalorder %s63, %s77
      %p79 = scmp.eq.s32.totalorder %s25, 0
      %p80 = por %p78, %p79
      %s82 = sadd.s32 %s81, 1
      %p85 = scmp.eq.s32.totalorder %s19, 1
      %p86 = scmp.ne.s32.totalorder %s81, %s83
      %p87 = scmp.eq.s32.totalorder %s19, 0
      %p88 = por %p86, %p87
      %p89 = scmp.ne.s32.totalorder %s81, %s83
      %p90 = scmp.eq.s32.totalorder %s24, 1
      %p91 = por %p89, %p90
      %p92 = scmp.ne.s32.totalorder %s83, %s84
      %p93 = scmp.eq.s32.totalorder %s24, 0
      %p94 = por %p92, %p93
      %p95 = scmp.ne.s32.totalorder %s83, %s84
      %p96 = scmp.eq.s32.totalorder %s25, 1
      %p97 = por %p95, %p96
      %p99 = scmp.ne.s32.totalorder %s84, %s98
      %p100 = scmp.eq.s32.totalorder %s25, 0
      %p101 = por %p99, %p100
      %s102 = ssub.s32 %s26, %s38
      %p103 = scmp.eq.s32.totalorder %s102, 0
      %s105 = sadd.s32 %s104, 1
      %s106 = scalar_select %p103, %s104, %s105
      %p109 = pneg %p103
      %p110 = scmp.eq.s32.totalorder %s19, 1
      %p111 = por %p109, %p110
      %p112 = scmp.ne.s32.totalorder %s104, %s107
      %p113 = scmp.eq.s32.totalorder %s19, 0
      %p114 = por %p112, %p113
      %p115 = scmp.ne.s32.totalorder %s104, %s107
      %p116 = scmp.eq.s32.totalorder %s24, 1
      %p117 = por %p115, %p116
      %p118 = scmp.ne.s32.totalorder %s107, %s108
      %p119 = scmp.eq.s32.totalorder %s24, 0
      %p120 = por %p118, %p119
      %p121 = scmp.ne.s32.totalorder %s107, %s108
      %p122 = scmp.eq.s32.totalorder %s25, 1
      %p123 = por %p121, %p122
      %p125 = scmp.ne.s32.totalorder %s108, %s124
      %p126 = scmp.eq.s32.totalorder %s25, 0
      %p127 = por %p125, %p126
      %s128 = ssub.s32 %s26, %s38
      %s129 = ssub.s32 %s27, %s34
      %s130 = sor.u32 %s128, %s129
      %p131 = scmp.eq.s32.totalorder %s130, 0
      %s133 = sadd.s32 %s132, 1
      %s134 = scalar_select %p131, %s132, %s133
      %p137 = pneg %p131
      %p138 = scmp.eq.s32.totalorder %s19, 1
      %p139 = por %p137, %p138
      %p140 = scmp.ne.s32.totalorder %s132, %s135
      %p141 = scmp.eq.s32.totalorder %s19, 0
      %p142 = por %p140, %p141
      %p143 = scmp.ne.s32.totalorder %s132, %s135
      %p144 = scmp.eq.s32.totalorder %s24, 1
      %p145 = por %p143, %p144
      %p146 = scmp.ne.s32.totalorder %s135, %s136
      %p147 = scmp.eq.s32.totalorder %s24, 0
      %p148 = por %p146, %p147
      %p149 = scmp.ne.s32.totalorder %s135, %s136
      %p150 = scmp.eq.s32.totalorder %s25, 1
      %p151 = por %p149, %p150
      %p153 = scmp.ne.s32.totalorder %s136, %s152
      %p154 = scmp.eq.s32.totalorder %s25, 0
      %p155 = por %p153, %p154
      %s156 = ssub.s32 %s26, %s38
      %s157 = ssub.s32 %s27, %s34
      %s158 = sor.u32 %s156, %s157
      %p159 = scmp.eq.s32.totalorder %s158, 0
      %s161 = sadd.s32 %s160, 1
      %s162 = scalar_select %p159, %s160, %s161
      %p165 = pneg %p159
      %p166 = scmp.eq.s32.totalorder %s19, 1
      %p167 = por %p165, %p166
      %p168 = scmp.ne.s32.totalorder %s160, %s163
      %p169 = scmp.eq.s32.totalorder %s19, 0
      %p170 = por %p168, %p169
      %p171 = scmp.ne.s32.totalorder %s160, %s163
      %p172 = scmp.eq.s32.totalorder %s24, 1
      %p173 = por %p171, %p172
      %p174 = scmp.ne.s32.totalorder %s163, %s164
      %p175 = scmp.eq.s32.totalorder %s24, 0
      %p176 = por %p174, %p175
      %p177 = scmp.ne.s32.totalorder %s163, %s164
      %p178 = scmp.eq.s32.totalorder %s25, 1
      %p179 = por %p177, %p178
      %p181 = scmp.ne.s32.totalorder %s164, %s180
      %p182 = scmp.eq.s32.totalorder %s25, 0
      %p183 = por %p181, %p182
      %s184 = ssub.s32 %s26, %s38
      %p185 = scmp.eq.s32.totalorder %s184, 0
      %s187 = sadd.s32 %s186, 1
      %s188 = scalar_select %p185, %s186, %s187
      %p191 = pneg %p185
      %p192 = scmp.eq.s32.totalorder %s19, 1
      %p193 = por %p191, %p192
      %p194 = scmp.ne.s32.totalorder %s186, %s189
      %p195 = scmp.eq.s32.totalorder %s19, 0
      %p196 = por %p194, %p195
      %p197 = scmp.ne.s32.totalorder %s186, %s189
      %p198 = scmp.eq.s32.totalorder %s24, 1
      %p199 = por %p197, %p198
      %p200 = scmp.ne.s32.totalorder %s189, %s190
      %p201 = scmp.eq.s32.totalorder %s24, 0
      %p202 = por %p200, %p201
      %p203 = scmp.ne.s32.totalorder %s189, %s190
      %p204 = scmp.eq.s32.totalorder %s25, 1
      %p205 = por %p203, %p204
      %p207 = scmp.ne.s32.totalorder %s190, %s206
      %p208 = scmp.eq.s32.totalorder %s25, 0
      %p209 = por %p207, %p208
      %s210 = ssub.s32 %s26, %s38
      %p211 = scmp.eq.s32.totalorder %s210, 0
      %s213 = sadd.s32 %s212, 1
      %s214 = scalar_select %p211, %s212, %s213
      %p217 = pneg %p211
      %p218 = scmp.eq.s32.totalorder %s19, 1
      %p219 = por %p217, %p218
      %p220 = scmp.ne.s32.totalorder %s212, %s215
      %p221 = scmp.eq.s32.totalorder %s19, 0
      %p222 = por %p220, %p221
      %p223 = scmp.ne.s32.totalorder %s212, %s215
      %p224 = scmp.eq.s32.totalorder %s24, 1
      %p225 = por %p223, %p224
      %p226 = scmp.ne.s32.totalorder %s215, %s216
      %p227 = scmp.eq.s32.totalorder %s24, 0
      %p228 = por %p226, %p227
      %p229 = scmp.ne.s32.totalorder %s215, %s216
      %p230 = scmp.eq.s32.totalorder %s25, 1
      %p231 = por %p229, %p230
      %p233 = scmp.ne.s32.totalorder %s216, %s232
      %p234 = scmp.eq.s32.totalorder %s25, 0
      %p235 = por %p233, %p234
      %s236 = ssub.s32 %s26, %s38
      %s237 = ssub.s32 %s27, %s34
      %s238 = sor.u32 %s236, %s237
      %p239 = scmp.eq.s32.totalorder %s238, 0
      %s241 = sadd.s32 %s240, 1
      %s242 = scalar_select %p239, %s240, %s241
      %p245 = pneg %p239
      %p246 = scmp.eq.s32.totalorder %s19, 1
      %p247 = por %p245, %p246
      %p248 = scmp.ne.s32.totalorder %s240, %s243
      %p249 = scmp.eq.s32.totalorder %s19, 0
      %p250 = por %p248, %p249
      %p251 = scmp.ne.s32.totalorder %s240, %s243
      %p252 = scmp.eq.s32.totalorder %s24, 1
      %p253 = por %p251, %p252
      %p254 = scmp.ne.s32.totalorder %s243, %s244
      %p255 = scmp.eq.s32.totalorder %s24, 0
      %p256 = por %p254, %p255
      %p257 = scmp.ne.s32.totalorder %s243, %s244
      %p258 = scmp.eq.s32.totalorder %s25, 1
      %p259 = por %p257, %p258
      %p261 = scmp.ne.s32.totalorder %s244, %s260
      %p262 = scmp.eq.s32.totalorder %s25, 0
      %p263 = por %p261, %p262
      %p264 = scmp.le.s32.totalorder 1, %s19
      %p265 = scmp.lt.s32.totalorder %s19, 3
      %p266 = pnand %p264, %p265
      %p267 = pneg %p266
      // Predicated region
      $region9: #{tpu_custom_call.1} parent=5 // pred_check
        _
      $region10: #{tpu_custom_call.1} parent=5 // pred_check_branch
        %269 = sbr.rel (%p266) target = $region12
      $region11: #{tpu_custom_call.1} parent=5 // pred_region
        %s270 = ssub.s32 %s19, 1
        // Predicated region
        $region13: #{tpu_custom_call.1} parent=11 // pred_check
          %p271 = pneg %p52
        $region14: #{tpu_custom_call.1} parent=11 // pred_check_branch
          %273 = sbr.rel (%p271) target = $region16
        $region15: #{tpu_custom_call.1} parent=11 // pred_region
          %s275 = ssub.s32 16, 16
          %276 = vsyncadd [#allocation4], %s275
          %s278 = sshll.u32 %s0, 4
          %s279 = int_to_ptr.vmem [resolvable:$true] %s278
          %281 = dma.vmem_to_smem %s279, 16, [#allocation2], [#allocation4]
        $region16: #{tpu_custom_call.1} parent=11 // pred_fallthru
          _
        // Predicated region
        $region17: #{tpu_custom_call.1} parent=11 // pred_check
          %p282 = pneg %p73
        $region18: #{tpu_custom_call.1} parent=11 // pred_check_branch
          %284 = sbr.rel (%p282) target = $region20
        $region19: #{tpu_custom_call.1} parent=11 // pred_region
          %s286 = ssub.s32 16, 16
          %287 = vsyncadd [#allocation6], %s286
          %s289 = sshll.u32 %s1, 4
          %s290 = int_to_ptr.vmem [resolvable:$true] %s289
          %292 = dma.vmem_to_smem %s290, 16, [#allocation5], [#allocation6]
        $region20: #{tpu_custom_call.1} parent=11 // pred_fallthru
          _
        // Predicated region
        $region21: #{tpu_custom_call.1} parent=11 // pred_check
          %p293 = pneg %p94
        $region22: #{tpu_custom_call.1} parent=11 // pred_check_branch
          %295 = sbr.rel (%p293) target = $region24
        $region23: #{tpu_custom_call.1} parent=11 // pred_region
          %s297 = ssub.s32 16, 16
          %298 = vsyncadd [#allocation6], %s297
          %s300 = sshll.u32 %s2, 4
          %s301 = int_to_ptr.vmem [resolvable:$true] %s300
          %303 = dma.vmem_to_smem %s301, 16, [#allocation7], [#allocation6]
        $region24: #{tpu_custom_call.1} parent=11 // pred_fallthru
          _
      $region12: #{tpu_custom_call.1} parent=5 // pred_fallthru
        _
      %p304 = scmp.lt.s32.totalorder %s19, 2
      // Predicated region
      $region25: #{tpu_custom_call.1} parent=5 // pred_check
        %p305 = pneg %p304
      $region26: #{tpu_custom_call.1} parent=5 // pred_check_branch
        %307 = sbr.rel (%p305) target = $region28
      $region27: #{tpu_custom_call.1} parent=5 // pred_region
        // Predicated region
        $region29: #{tpu_custom_call.1} parent=27 // pred_check
          %p308 = pneg %p114
        $region30: #{tpu_custom_call.1} parent=27 // pred_check_branch
          %310 = sbr.rel (%p308) target = $region32
        $region31: #{tpu_custom_call.1} parent=27 // pred_region
          %p311 = scmp.lt.s32.totalorder %s26, 1
          %s312 = scalar_select %p311, %s26, 1
          %s313 = smul.addr %s312, 6
          %s314 = smul.addr %s313, 4
          %s315 = scalar_lea.vmem %s3, %s314
        $region32: #{tpu_custom_call.1} parent=27 // pred_fallthru
          _
        // Predicated region
        $region33: #{tpu_custom_call.1} parent=27 // pred_check
          %p316 = pneg %p142
        $region34: #{tpu_custom_call.1} parent=27 // pred_check_branch
          %318 = sbr.rel (%p316) target = $region36
        $region35: #{tpu_custom_call.1} parent=27 // pred_region
          %s319 = smul.u32 4, %s27
          %p320 = scmp.lt.s32.totalorder %s26, 1
          %s321 = scalar_select %p320, %s26, 1
          %p322 = scmp.lt.s32.totalorder %s319, 3
          %s323 = scalar_select %p322, %s319, 3
          %s324 = smul.addr %s321, 4
          %s325 = sadd.s32 %s323, %s324
          %s326 = smul.addr %s325, 4
          %s327 = scalar_lea.vmem %s4, %s326
          %s328 = smul.u32 4, %s27
        $region36: #{tpu_custom_call.1} parent=27 // pred_fallthru
          _
        // Predicated region
        $region37: #{tpu_custom_call.1} parent=27 // pred_check
          %p329 = pneg %p170
        $region38: #{tpu_custom_call.1} parent=27 // pred_check_branch
          %331 = sbr.rel (%p329) target = $region40
        $region39: #{tpu_custom_call.1} parent=27 // pred_region
          %s332 = smul.u32 4, %s27
          %p333 = scmp.lt.s32.totalorder %s26, 1
          %s334 = scalar_select %p333, %s26, 1
          %p335 = scmp.lt.s32.totalorder %s332, 3
          %s336 = scalar_select %p335, %s332, 3
          %s337 = smul.addr %s334, 4
          %s338 = sadd.s32 %s336, %s337
          %s339 = smul.addr %s338, 8
          %s340 = scalar_lea.vmem %s5, %s339
          %s341 = smul.u32 4, %s27
        $region40: #{tpu_custom_call.1} parent=27 // pred_fallthru
          _
        // Predicated region
        $region41: #{tpu_custom_call.1} parent=27 // pred_check
          %p342 = pneg %p196
        $region42: #{tpu_custom_call.1} parent=27 // pred_check_branch
          %344 = sbr.rel (%p342) target = $region44
        $region43: #{tpu_custom_call.1} parent=27 // pred_region
          %p345 = scmp.lt.s32.totalorder %s26, 1
          %s346 = scalar_select %p345, %s26, 1
          %s347 = scalar_lea.vmem %s6, %s346
        $region44: #{tpu_custom_call.1} parent=27 // pred_fallthru
          _
        // Predicated region
        $region45: #{tpu_custom_call.1} parent=27 // pred_check
          %p348 = pneg %p222
        $region46: #{tpu_custom_call.1} parent=27 // pred_check_branch
          %350 = sbr.rel (%p348) target = $region48
        $region47: #{tpu_custom_call.1} parent=27 // pred_region
          %p351 = scmp.lt.s32.totalorder %s26, 1
          %s352 = scalar_select %p351, %s26, 1
          %s353 = smul.addr %s352, 2
          %s354 = smul.addr %s353, 4
          %s355 = scalar_lea.vmem %s7, %s354
        $region48: #{tpu_custom_call.1} parent=27 // pred_fallthru
          _
      $region28: #{tpu_custom_call.1} parent=5 // pred_fallthru
        _
      %p356 = scmp.le.s32.totalorder 1, %s19
      %p357 = scmp.lt.s32.totalorder %s19, 3
      %p358 = pnand %p356, %p357
      %p359 = pneg %p358
      // Predicated region
      $region49: #{tpu_custom_call.1} parent=5 // pred_check
        _
      $region50: #{tpu_custom_call.1} parent=5 // pred_check_branch
        %361 = sbr.rel (%p358) target = $region52
      $region51: #{tpu_custom_call.1} parent=5 // pred_region
        %s362 = ssub.s32 %s19, 1
        // Predicated region
        $region53: #{tpu_custom_call.1} parent=51 // pred_check
          %p363 = pneg %p52
        $region54: #{tpu_custom_call.1} parent=51 // pred_check_branch
          %365 = sbr.rel (%p363) target = $region56
        $region55: #{tpu_custom_call.1} parent=51 // pred_region
          %366 = dma.done [#allocation4], 16
        $region56: #{tpu_custom_call.1} parent=51 // pred_fallthru
          _
        // Predicated region
        $region57: #{tpu_custom_call.1} parent=51 // pred_check
          %p367 = pneg %p73
        $region58: #{tpu_custom_call.1} parent=51 // pred_check_branch
          %369 = sbr.rel (%p367) target = $region60
        $region59: #{tpu_custom_call.1} parent=51 // pred_region
          %370 = dma.done [#allocation6], 16
        $region60: #{tpu_custom_call.1} parent=51 // pred_fallthru
          _
        // Predicated region
        $region61: #{tpu_custom_call.1} parent=51 // pred_check
          %p371 = pneg %p94
        $region62: #{tpu_custom_call.1} parent=51 // pred_check_branch
          %373 = sbr.rel (%p371) target = $region64
        $region63: #{tpu_custom_call.1} parent=51 // pred_region
          %374 = dma.done [#allocation6], 16
        $region64: #{tpu_custom_call.1} parent=51 // pred_fallthru
          _
        %375 = sfence
        %p376 = pneg %p52
        %p377 = pneg %p49
        %p378 = pneg %p73
        %p379 = pneg %p70
        %p380 = pneg %p94
        %p381 = pneg %p91
        %p382 = scmp.lt.s32.totalorder %s28, 1
        %s383 = scalar_select %p382, %s28, 1
        %s384 = smul.addr %s383, 6
        %s385 = smul.addr %s384, 4
        %s386 = scalar_lea.vmem %s3, %s385
        %p387 = pneg %p120
        %p388 = pneg %p117
        %s389 = smul.u32 4, %s29
        %p390 = scmp.lt.s32.totalorder %s28, 1
        %s391 = scalar_select %p390, %s28, 1
        %p392 = scmp.lt.s32.totalorder %s389, 3
        %s393 = scalar_select %p392, %s389, 3
        %s394 = smul.addr %s391, 4
        %s395 = sadd.s32 %s393, %s394
        %s396 = smul.addr %s395, 4
        %s397 = scalar_lea.vmem %s4, %s396
        %p398 = pneg %p148
        %p399 = pneg %p145
        %s400 = smul.u32 4, %s29
        %p401 = scmp.lt.s32.totalorder %s28, 1
        %s402 = scalar_select %p401, %s28, 1
        %p403 = scmp.lt.s32.totalorder %s400, 3
        %s404 = scalar_select %p403, %s400, 3
        %s405 = smul.addr %s402, 4
        %s406 = sadd.s32 %s404, %s405
        %s407 = smul.addr %s406, 8
        %s408 = scalar_lea.vmem %s5, %s407
        %p409 = pneg %p176
        %p410 = pneg %p173
        %p411 = scmp.lt.s32.totalorder %s28, 1
        %s412 = scalar_select %p411, %s28, 1
        %s413 = scalar_lea.vmem %s6, %s412
        %p414 = pneg %p202
        %p415 = pneg %p199
        %p416 = scmp.lt.s32.totalorder %s28, 1
        %s417 = scalar_select %p416, %s28, 1
        %s418 = smul.addr %s417, 2
        %s419 = smul.addr %s418, 4
        %s420 = scalar_lea.vmem %s7, %s419
        %p421 = pneg %p228
        %p422 = pneg %p225
        %p423 = pneg %p256
        %p424 = pneg %p253
        %s425 = sand.u32 %s243, 1
        %s426 = scalar_lea.sflag [#allocation3], %s425
        %s427 = sand.u32 %s243, 1
        %s428 = smul.addr %s427, 96
        %s429 = scalar_lea.vmem [#allocation8], %s428
        %p430 = scmp.lt.s32.totalorder %s28, 1
        %s431 = scalar_select %p430, %s28, 1
        %s432 = smul.addr %s431, 6
        %s433 = smul.addr %s432, 4
        %s434 = scalar_lea.vmem %s3, %s433
        %s435 = smul.u32 4, %s29
        %p436 = scmp.lt.s32.totalorder %s28, 1
        %s437 = scalar_select %p436, %s28, 1
        %p438 = scmp.lt.s32.totalorder %s435, 3
        %s439 = scalar_select %p438, %s435, 3
        %s440 = smul.addr %s437, 4
        %s441 = sadd.s32 %s439, %s440
        %s442 = smul.addr %s441, 4
        %s443 = scalar_lea.vmem %s4, %s442
        %s444 = smul.u32 4, %s29
        %s445 = smul.u32 4, %s29
        %p446 = scmp.lt.s32.totalorder %s28, 1
        %s447 = scalar_select %p446, %s28, 1
        %p448 = scmp.lt.s32.totalorder %s445, 3
        %s449 = scalar_select %p448, %s445, 3
        %s450 = smul.addr %s447, 4
        %s451 = sadd.s32 %s449, %s450
        %s452 = smul.addr %s451, 8
        %s453 = scalar_lea.vmem %s5, %s452
        %s454 = smul.u32 4, %s29
        %p455 = scmp.lt.s32.totalorder %s28, 1
        %s456 = scalar_select %p455, %s28, 1
        %s457 = scalar_lea.vmem %s6, %s456
        %p458 = scmp.lt.s32.totalorder %s28, 1
        %s459 = scalar_select %p458, %s28, 1
        %s460 = smul.addr %s459, 2
        %s461 = smul.addr %s460, 4
        %s462 = scalar_lea.vmem %s7, %s461
        %s463 = smul.u32 4, %s29
        %v465 = vld [vmem:[%s443] sm:$0xf]
        %v466 = vld [vmem:[%s443 + $0x4] sm:$0xf]
        %v467 = vld [vmem:[%s443 + $0x8] sm:$0xf]
        %v468 = vld [vmem:[%s443 + $0xc] sm:$0xf]
        %v469 = vld [vmem:[%s462] sm:$0xf]
        %v470 = vld [vmem:[%s462 + $0x4] sm:$0xf]
        %v471 = vld [vmem:[%s453] sm:$0xff]
        %v472 = vld [vmem:[%s453 + $0x8] sm:$0xff]
        %v473 = vld [vmem:[%s453 + $0x10] sm:$0xff]
        %v474 = vld [vmem:[%s453 + $0x18] sm:$0xff]
        %v475 = vld [vmem:[%s457] sm:$0x1]
        %477 = vset.pattern.permute.xlu0 0
        %478 = vperm.xlu0 %477, %v471
        %v479 = vpop.permute.xlu0 %478
        %482 = vset.pattern.permute.xlu0 0
        %483 = vperm.xlu0 %482, %v472
        %v484 = vpop.permute.xlu0 %483
        %487 = vset.pattern.permute.xlu0 0
        %488 = vperm.xlu0 %487, %v473
        %v489 = vpop.permute.xlu0 %488
        %492 = vset.pattern.permute.xlu0 0
        %493 = vperm.xlu0 %492, %v474
        %v494 = vpop.permute.xlu0 %493
        %v497 = vlaneseq
        %v498 = vshrl.u32 %v497, 7
        %v499 = vsub.s32 0, %v498
        %v500 = vrot.slane %v475, %v499
        %v502 = vmul.f32 %v479, %v500
        %v503 = vmul.f32 %v484, %v500
        %v504 = vmul.f32 %v489, %v500
        %v505 = vmul.f32 %v494, %v500
        %v506 = vld [vmem:[%s434] sm:$0xf]
        %v507 = vld [vmem:[%s434 + $0x4] sm:$0xf]
        %v512 = vunpack.c.l.b16 %v465
        %v513 = vunpack.c.l.b16 %v466
        %v514 = vunpack.c.l.b16 %v467
        %v515 = vunpack.c.l.b16 %v468
        %v516 = vpack.c.b16 %v513, %v512
        %v517 = vpack.c.b16 %v515, %v514
        %v520 = vunpack.c.l.b16 %v506
        %v521 = vunpack.c.l.b16 %v507
        %v522 = vpack.c.b16 %v521, %v520
        %vm524 = vcmask 130048
        %v526 = vsel %vm524, %v516, 0
        %v529 = vsel %vm524, %v517, 0
        %531 = vmatprep.subr.bf16.mxu0 0
        %532 = vmatpush1.bf16.msra.mxu0 0
        %533 = vmatprep.subr.bf16.mxu0 0
        %534 = vmatpush1.bf16.msra.mxu0 0
        %535 = vmatprep.subr.bf16.mxu0 0
        %536 = vmatpush1.bf16.msra.mxu0 0
        %537 = vmatprep.subr.bf16.mxu0 0
        %538 = vmatpush1.bf16.msra.mxu0 0
        %539 = vmatprep.subr.bf16.mxu0 0
        %540 = vmatpush1.bf16.msra.mxu0 0
        %541 = vmatprep.subr.bf16.mxu0 0
        %542 = vmatpush1.bf16.msra.mxu0 0
        %543 = vmatprep.subr.bf16.mxu0 0
        %544 = vmatpush1.bf16.msra.mxu0 0
        %545 = vmatprep.subr.bf16.mxu0 0
        %546 = vmatpush1.bf16.msra.mxu0 %v522
        %547 = vmatprep.subr.bf16.mxu0 0
        %548 = vmatpush2.bf16.msra.mxu0 0
        %549 = vmatprep.subr.bf16.mxu0 0
        %550 = vmatpush2.bf16.msra.mxu0 0
        %551 = vmatprep.subr.bf16.mxu0 0
        %552 = vmatpush2.bf16.msra.mxu0 0
        %553 = vmatprep.subr.bf16.mxu0 0
        %554 = vmatpush2.bf16.msra.mxu0 0
        %555 = vmatprep.subr.bf16.mxu0 0
        %556 = vmatpush2.bf16.msra.mxu0 0
        %557 = vmatprep.subr.bf16.mxu0 0
        %558 = vmatpush2.bf16.msra.mxu0 0
        %559 = vmatprep.subr.bf16.mxu0 0
        %560 = vmatpush2.bf16.msra.mxu0 0
        %561 = vmatprep.subr.bf16.mxu0 0
        %562 = vmatpush2.bf16.msra.mxu0 0
        %563 = vmatprep.mubr.bf16.mxu0 0
        %564 = vmatmul.mubr.bf16.gmra.mxu0 %v526
        %v565 = vpop.f32.mrf.mxu0
        %v566 = vadd.f32 0.0, %v565
        %v567 = vpop.f32.mrf.mxu0
        %v568 = vpop.f32.mrf.mxu0
        %v569 = vadd.f32 0.0, %v568
        %v570 = vpop.f32.mrf.mxu0
        %571 = vmatprep.mubr.bf16.mxu0 0
        %572 = vmatmul.mubr.bf16.gmra.mxu0 %v529
        %v573 = vpop.f32.mrf.mxu0
        %v574 = vadd.f32 0.0, %v573
        %v575 = vpop.f32.mrf.mxu0
        %v576 = vpop.f32.mrf.mxu0
        %v577 = vadd.f32 0.0, %v576
        %v578 = vpop.f32.mrf.mxu0
        %579 = vdwg.mxu0
        %v580 = vpack.c.bf16 %v569, %v566
        %v581 = vpack.c.bf16 %v577, %v574
        %v584 = vunpack.c.l.b16 %v469
        %v585 = vunpack.c.l.b16 %v470
        %v586 = vpack.c.b16 %v585, %v584
        %v589 = vsel %vm524, %v580, 0
        %v592 = vsel %vm524, %v581, 0
        %594 = vmatprep.subr.bf16.mxu0 0
        %595 = vmatpush1.bf16.msra.mxu0 0
        %596 = vmatprep.subr.bf16.mxu0 0
        %597 = vmatpush1.bf16.msra.mxu0 0
        %598 = vmatprep.subr.bf16.mxu0 0
        %599 = vmatpush1.bf16.msra.mxu0 0
        %600 = vmatprep.subr.bf16.mxu0 0
        %601 = vmatpush1.bf16.msra.mxu0 0
        %602 = vmatprep.subr.bf16.mxu0 0
        %603 = vmatpush1.bf16.msra.mxu0 0
        %604 = vmatprep.subr.bf16.mxu0 0
        %605 = vmatpush1.bf16.msra.mxu0 0
        %606 = vmatprep.subr.bf16.mxu0 0
        %607 = vmatpush1.bf16.msra.mxu0 0
        %608 = vmatprep.subr.bf16.mxu0 0
        %609 = vmatpush1.bf16.msra.mxu0 %v586
        %610 = vmatprep.subr.bf16.mxu0 0
        %611 = vmatpush2.bf16.msra.mxu0 0
        %612 = vmatprep.subr.bf16.mxu0 0
        %613 = vmatpush2.bf16.msra.mxu0 0
        %614 = vmatprep.subr.bf16.mxu0 0
        %615 = vmatpush2.bf16.msra.mxu0 0
        %616 = vmatprep.subr.bf16.mxu0 0
        %617 = vmatpush2.bf16.msra.mxu0 0
        %618 = vmatprep.subr.bf16.mxu0 0
        %619 = vmatpush2.bf16.msra.mxu0 0
        %620 = vmatprep.subr.bf16.mxu0 0
        %621 = vmatpush2.bf16.msra.mxu0 0
        %622 = vmatprep.subr.bf16.mxu0 0
        %623 = vmatpush2.bf16.msra.mxu0 0
        %624 = vmatprep.subr.bf16.mxu0 0
        %625 = vmatpush2.bf16.msra.mxu0 0
        %626 = vmatprep.mubr.bf16.mxu0 0
        %627 = vmatmul.mubr.bf16.gmra.mxu0 %v589
        %v628 = vpop.f32.mrf.mxu0
        %v629 = vadd.f32 0.0, %v628
        %v630 = vpop.f32.mrf.mxu0
        %v631 = vpop.f32.mrf.mxu0
        %v632 = vadd.f32 0.0, %v631
        %v633 = vpop.f32.mrf.mxu0
        %634 = vmatprep.mubr.bf16.mxu0 0
        %635 = vmatmul.mubr.bf16.gmra.mxu0 %v592
        %v636 = vpop.f32.mrf.mxu0
        %v637 = vadd.f32 0.0, %v636
        %v638 = vpop.f32.mrf.mxu0
        %v639 = vpop.f32.mrf.mxu0
        %v640 = vadd.f32 0.0, %v639
        %v641 = vpop.f32.mrf.mxu0
        %642 = vdwg.mxu0
        %s643 = sld [smem:[#allocation2]]
        %v644 = vstv %s643
        %v645 = vmul.f32 %v629, %v644
        %v646 = vmul.f32 %v632, %v644
        %v647 = vmul.f32 %v637, %v644
        %v648 = vmul.f32 %v640, %v644
        %s649 = sld [smem:[#allocation5]]
        %v650 = vstv %s649
        %v651 = vmul.f32 %v650, %v502
        %v652 = vmul.f32 %v650, %v503
        %v653 = vmul.f32 %v650, %v504
        %v654 = vmul.f32 %v650, %v505
        %v655 = vadd.f32 %v645, %v651
        %v656 = vadd.f32 %v646, %v652
        %v657 = vadd.f32 %v647, %v653
        %v658 = vadd.f32 %v648, %v654
        %vm659 = vcmask 261120
        %660 = vst.msk [vmem:[%s429] sm:$0xff] %vm659, %v655
        %661 = vst.msk [vmem:[%s429 + $0x8] sm:$0xff] %vm659, %v656
        %662 = vst.msk [vmem:[%s429 + $0x10] sm:$0xff] %vm659, %v657
        %663 = vst.msk [vmem:[%s429 + $0x18] sm:$0xff] %vm659, %v658
        %s664 = scalar_lea.vmem %s434, 8
        %v665 = vld [vmem:[%s664] sm:$0xf]
        %v666 = vld [vmem:[%s664 + $0x4] sm:$0xf]
        %v669 = vunpack.c.l.b16 %v665
        %v670 = vunpack.c.l.b16 %v666
        %v671 = vpack.c.b16 %v670, %v669
        %673 = vmatprep.subr.bf16.mxu0 0
        %674 = vmatpush1.bf16.msra.mxu0 0
        %675 = vmatprep.subr.bf16.mxu0 0
        %676 = vmatpush1.bf16.msra.mxu0 0
        %677 = vmatprep.subr.bf16.mxu0 0
        %678 = vmatpush1.bf16.msra.mxu0 0
        %679 = vmatprep.subr.bf16.mxu0 0
        %680 = vmatpush1.bf16.msra.mxu0 0
        %681 = vmatprep.subr.bf16.mxu0 0
        %682 = vmatpush1.bf16.msra.mxu0 0
        %683 = vmatprep.subr.bf16.mxu0 0
        %684 = vmatpush1.bf16.msra.mxu0 0
        %685 = vmatprep.subr.bf16.mxu0 0
        %686 = vmatpush1.bf16.msra.mxu0 0
        %687 = vmatprep.subr.bf16.mxu0 0
        %688 = vmatpush1.bf16.msra.mxu0 %v671
        %689 = vmatprep.subr.bf16.mxu0 0
        %690 = vmatpush2.bf16.msra.mxu0 0
        %691 = vmatprep.subr.bf16.mxu0 0
        %692 = vmatpush2.bf16.msra.mxu0 0
        %693 = vmatprep.subr.bf16.mxu0 0
        %694 = vmatpush2.bf16.msra.mxu0 0
        %695 = vmatprep.subr.bf16.mxu0 0
        %696 = vmatpush2.bf16.msra.mxu0 0
        %697 = vmatprep.subr.bf16.mxu0 0
        %698 = vmatpush2.bf16.msra.mxu0 0
        %699 = vmatprep.subr.bf16.mxu0 0
        %700 = vmatpush2.bf16.msra.mxu0 0
        %701 = vmatprep.subr.bf16.mxu0 0
        %702 = vmatpush2.bf16.msra.mxu0 0
        %703 = vmatprep.subr.bf16.mxu0 0
        %704 = vmatpush2.bf16.msra.mxu0 0
        %705 = vmatprep.mubr.bf16.mxu0 0
        %706 = vmatmul.mubr.bf16.gmra.mxu0 %v526
        %v707 = vpop.f32.mrf.mxu0
        %v708 = vadd.f32 0.0, %v707
        %v709 = vpop.f32.mrf.mxu0
        %v710 = vpop.f32.mrf.mxu0
        %v711 = vadd.f32 0.0, %v710
        %v712 = vpop.f32.mrf.mxu0
        %713 = vmatprep.mubr.bf16.mxu0 0
        %714 = vmatmul.mubr.bf16.gmra.mxu0 %v529
        %v715 = vpop.f32.mrf.mxu0
        %v716 = vadd.f32 0.0, %v715
        %v717 = vpop.f32.mrf.mxu0
        %v718 = vpop.f32.mrf.mxu0
        %v719 = vadd.f32 0.0, %v718
        %v720 = vpop.f32.mrf.mxu0
        %721 = vdwg.mxu0
        %v722 = vpack.c.bf16 %v711, %v708
        %v723 = vpack.c.bf16 %v719, %v716
        %v725 = vsel %vm524, %v722, 0
        %v728 = vsel %vm524, %v723, 0
        %730 = vmatprep.subr.bf16.mxu0 0
        %731 = vmatpush1.bf16.msra.mxu0 0
        %732 = vmatprep.subr.bf16.mxu0 0
        %733 = vmatpush1.bf16.msra.mxu0 0
        %734 = vmatprep.subr.bf16.mxu0 0
        %735 = vmatpush1.bf16.msra.mxu0 0
        %736 = vmatprep.subr.bf16.mxu0 0
        %737 = vmatpush1.bf16.msra.mxu0 0
        %738 = vmatprep.subr.bf16.mxu0 0
        %739 = vmatpush1.bf16.msra.mxu0 0
        %740 = vmatprep.subr.bf16.mxu0 0
        %741 = vmatpush1.bf16.msra.mxu0 0
        %742 = vmatprep.subr.bf16.mxu0 0
        %743 = vmatpush1.bf16.msra.mxu0 0
        %744 = vmatprep.subr.bf16.mxu0 0
        %745 = vmatpush1.bf16.msra.mxu0 %v586
        %746 = vmatprep.subr.bf16.mxu0 0
        %747 = vmatpush2.bf16.msra.mxu0 0
        %748 = vmatprep.subr.bf16.mxu0 0
        %749 = vmatpush2.bf16.msra.mxu0 0
        %750 = vmatprep.subr.bf16.mxu0 0
        %751 = vmatpush2.bf16.msra.mxu0 0
        %752 = vmatprep.subr.bf16.mxu0 0
        %753 = vmatpush2.bf16.msra.mxu0 0
        %754 = vmatprep.subr.bf16.mxu0 0
        %755 = vmatpush2.bf16.msra.mxu0 0
        %756 = vmatprep.subr.bf16.mxu0 0
        %757 = vmatpush2.bf16.msra.mxu0 0
        %758 = vmatprep.subr.bf16.mxu0 0
        %759 = vmatpush2.bf16.msra.mxu0 0
        %760 = vmatprep.subr.bf16.mxu0 0
        %761 = vmatpush2.bf16.msra.mxu0 0
        %762 = vmatprep.mubr.bf16.mxu0 0
        %763 = vmatmul.mubr.bf16.gmra.mxu0 %v725
        %v764 = vpop.f32.mrf.mxu0
        %v765 = vadd.f32 0.0, %v764
        %v766 = vpop.f32.mrf.mxu0
        %v767 = vpop.f32.mrf.mxu0
        %v768 = vadd.f32 0.0, %v767
        %v769 = vpop.f32.mrf.mxu0
        %770 = vmatprep.mubr.bf16.mxu0 0
        %771 = vmatmul.mubr.bf16.gmra.mxu0 %v728
        %v772 = vpop.f32.mrf.mxu0
        %v773 = vadd.f32 0.0, %v772
        %v774 = vpop.f32.mrf.mxu0
        %v775 = vpop.f32.mrf.mxu0
        %v776 = vadd.f32 0.0, %v775
        %v777 = vpop.f32.mrf.mxu0
        %778 = vdwg.mxu0
        %s779 = sld [smem:[#allocation2 + $0x1]]
        %v780 = vstv %s779
        %v781 = vmul.f32 %v765, %v780
        %v782 = vmul.f32 %v768, %v780
        %v783 = vmul.f32 %v773, %v780
        %v784 = vmul.f32 %v776, %v780
        %s785 = sld [smem:[#allocation5 + $0x1]]
        %v786 = vstv %s785
        %v787 = vmul.f32 %v786, %v502
        %v788 = vmul.f32 %v786, %v503
        %v789 = vmul.f32 %v786, %v504
        %v790 = vmul.f32 %v786, %v505
        %v791 = vadd.f32 %v781, %v787
        %v792 = vadd.f32 %v782, %v788
        %v793 = vadd.f32 %v783, %v789
        %v794 = vadd.f32 %v784, %v790
        %s795 = scalar_lea.vmem %s429, 32 [#allocation8]
        %796 = vst.msk [vmem:[%s795] sm:$0xff] %vm659, %v791
        %797 = vst.msk [vmem:[%s795 + $0x8] sm:$0xff] %vm659, %v792
        %798 = vst.msk [vmem:[%s795 + $0x10] sm:$0xff] %vm659, %v793
        %799 = vst.msk [vmem:[%s795 + $0x18] sm:$0xff] %vm659, %v794
        %s800 = scalar_lea.vmem %s434, 16
        %v801 = vld [vmem:[%s800] sm:$0xf]
        %v802 = vld [vmem:[%s800 + $0x4] sm:$0xf]
        %v805 = vunpack.c.l.b16 %v801
        %v806 = vunpack.c.l.b16 %v802
        %v807 = vpack.c.b16 %v806, %v805
        %809 = vmatprep.subr.bf16.mxu0 0
        %810 = vmatpush1.bf16.msra.mxu0 0
        %811 = vmatprep.subr.bf16.mxu0 0
        %812 = vmatpush1.bf16.msra.mxu0 0
        %813 = vmatprep.subr.bf16.mxu0 0
        %814 = vmatpush1.bf16.msra.mxu0 0
        %815 = vmatprep.subr.bf16.mxu0 0
        %816 = vmatpush1.bf16.msra.mxu0 0
        %817 = vmatprep.subr.bf16.mxu0 0
        %818 = vmatpush1.bf16.msra.mxu0 0
        %819 = vmatprep.subr.bf16.mxu0 0
        %820 = vmatpush1.bf16.msra.mxu0 0
        %821 = vmatprep.subr.bf16.mxu0 0
        %822 = vmatpush1.bf16.msra.mxu0 0
        %823 = vmatprep.subr.bf16.mxu0 0
        %824 = vmatpush1.bf16.msra.mxu0 %v807
        %825 = vmatprep.subr.bf16.mxu0 0
        %826 = vmatpush2.bf16.msra.mxu0 0
        %827 = vmatprep.subr.bf16.mxu0 0
        %828 = vmatpush2.bf16.msra.mxu0 0
        %829 = vmatprep.subr.bf16.mxu0 0
        %830 = vmatpush2.bf16.msra.mxu0 0
        %831 = vmatprep.subr.bf16.mxu0 0
        %832 = vmatpush2.bf16.msra.mxu0 0
        %833 = vmatprep.subr.bf16.mxu0 0
        %834 = vmatpush2.bf16.msra.mxu0 0
        %835 = vmatprep.subr.bf16.mxu0 0
        %836 = vmatpush2.bf16.msra.mxu0 0
        %837 = vmatprep.subr.bf16.mxu0 0
        %838 = vmatpush2.bf16.msra.mxu0 0
        %839 = vmatprep.subr.bf16.mxu0 0
        %840 = vmatpush2.bf16.msra.mxu0 0
        %841 = vmatprep.mubr.bf16.mxu0 0
        %842 = vmatmul.mubr.bf16.gmra.mxu0 %v526
        %v843 = vpop.f32.mrf.mxu0
        %v844 = vadd.f32 0.0, %v843
        %v845 = vpop.f32.mrf.mxu0
        %v846 = vpop.f32.mrf.mxu0
        %v847 = vadd.f32 0.0, %v846
        %v848 = vpop.f32.mrf.mxu0
        %849 = vmatprep.mubr.bf16.mxu0 0
        %850 = vmatmul.mubr.bf16.gmra.mxu0 %v529
        %v851 = vpop.f32.mrf.mxu0
        %v852 = vadd.f32 0.0, %v851
        %v853 = vpop.f32.mrf.mxu0
        %v854 = vpop.f32.mrf.mxu0
        %v855 = vadd.f32 0.0, %v854
        %v856 = vpop.f32.mrf.mxu0
        %857 = vdwg.mxu0
        %v858 = vpack.c.bf16 %v847, %v844
        %v859 = vpack.c.bf16 %v855, %v852
        %v861 = vsel %vm524, %v858, 0
        %v864 = vsel %vm524, %v859, 0
        %866 = vmatprep.subr.bf16.mxu0 0
        %867 = vmatpush1.bf16.msra.mxu0 0
        %868 = vmatprep.subr.bf16.mxu0 0
        %869 = vmatpush1.bf16.msra.mxu0 0
        %870 = vmatprep.subr.bf16.mxu0 0
        %871 = vmatpush1.bf16.msra.mxu0 0
        %872 = vmatprep.subr.bf16.mxu0 0
        %873 = vmatpush1.bf16.msra.mxu0 0
        %874 = vmatprep.subr.bf16.mxu0 0
        %875 = vmatpush1.bf16.msra.mxu0 0
        %876 = vmatprep.subr.bf16.mxu0 0
        %877 = vmatpush1.bf16.msra.mxu0 0
        %878 = vmatprep.subr.bf16.mxu0 0
        %879 = vmatpush1.bf16.msra.mxu0 0
        %880 = vmatprep.subr.bf16.mxu0 0
        %881 = vmatpush1.bf16.msra.mxu0 %v586
        %882 = vmatprep.subr.bf16.mxu0 0
        %883 = vmatpush2.bf16.msra.mxu0 0
        %884 = vmatprep.subr.bf16.mxu0 0
        %885 = vmatpush2.bf16.msra.mxu0 0
        %886 = vmatprep.subr.bf16.mxu0 0
        %887 = vmatpush2.bf16.msra.mxu0 0
        %888 = vmatprep.subr.bf16.mxu0 0
        %889 = vmatpush2.bf16.msra.mxu0 0
        %890 = vmatprep.subr.bf16.mxu0 0
        %891 = vmatpush2.bf16.msra.mxu0 0
        %892 = vmatprep.subr.bf16.mxu0 0
        %893 = vmatpush2.bf16.msra.mxu0 0
        %894 = vmatprep.subr.bf16.mxu0 0
        %895 = vmatpush2.bf16.msra.mxu0 0
        %896 = vmatprep.subr.bf16.mxu0 0
        %897 = vmatpush2.bf16.msra.mxu0 0
        %898 = vmatprep.mubr.bf16.mxu0 0
        %899 = vmatmul.mubr.bf16.gmra.mxu0 %v861
        %v900 = vpop.f32.mrf.mxu0
        %v901 = vadd.f32 0.0, %v900
        %v902 = vpop.f32.mrf.mxu0
        %v903 = vpop.f32.mrf.mxu0
        %v904 = vadd.f32 0.0, %v903
        %v905 = vpop.f32.mrf.mxu0
        %906 = vmatprep.mubr.bf16.mxu0 0
        %907 = vmatmul.mubr.bf16.gmra.mxu0 %v864
        %v908 = vpop.f32.mrf.mxu0
        %v909 = vadd.f32 0.0, %v908
        %v910 = vpop.f32.mrf.mxu0
        %v911 = vpop.f32.mrf.mxu0
        %v912 = vadd.f32 0.0, %v911
        %v913 = vpop.f32.mrf.mxu0
        %914 = vdwg.mxu0
        %s915 = sld [smem:[#allocation2 + $0x2]]
        %v916 = vstv %s915
        %v917 = vmul.f32 %v901, %v916
        %v918 = vmul.f32 %v904, %v916
        %v919 = vmul.f32 %v909, %v916
        %v920 = vmul.f32 %v912, %v916
        %s921 = sld [smem:[#allocation5 + $0x2]]
        %v922 = vstv %s921
        %v923 = vmul.f32 %v922, %v502
        %v924 = vmul.f32 %v922, %v503
        %v925 = vmul.f32 %v922, %v504
        %v926 = vmul.f32 %v922, %v505
        %v927 = vadd.f32 %v917, %v923
        %v928 = vadd.f32 %v918, %v924
        %v929 = vadd.f32 %v919, %v925
        %v930 = vadd.f32 %v920, %v926
        %s931 = scalar_lea.vmem %s429, 64 [#allocation8]
        %932 = vst.msk [vmem:[%s931] sm:$0xff] %vm659, %v927
        %933 = vst.msk [vmem:[%s931 + $0x8] sm:$0xff] %vm659, %v928
        %934 = vst.msk [vmem:[%s931 + $0x10] sm:$0xff] %vm659, %v929
        %935 = vst.msk [vmem:[%s931 + $0x18] sm:$0xff] %vm659, %v930
        %s936 = sand.u32 %s243, 1
        %s937 = scalar_lea.sflag [#allocation3], %s936
        %s938 = sand.u32 %s243, 1
        %s939 = smul.addr %s938, 96
        %s940 = scalar_lea.vmem [#allocation8], %s939
        // Predicated region
        $region65: #{tpu_custom_call.1} parent=51 // pred_check
          %p941 = pneg %p253
        $region66: #{tpu_custom_call.1} parent=51 // pred_check_branch
          %943 = sbr.rel (%p941) target = $region68
        $region67: #{tpu_custom_call.1} parent=51 // pred_region
          %s944 = smul.u32 4, %s29
          %s946 = ssub.s32 1536, 1536
          %947 = vsyncadd %s937, %s946
          %s948 = smul.addr %s28, 12
          %s949 = sadd.s32 %s944, %s948
          %s950 = smul.addr %s949, 128
          %s951 = scalar_lea.hbm %s8, %s950
          %s952 = sshll.u32 %s940, 4
          %s953 = int_to_ptr.vmem [resolvable:$true] %s952
          %958 = dma.vmem_to_hbm [thread:$0]  %s953, 1536, %s951, %s937, 128, 128, 8
        $region68: #{tpu_custom_call.1} parent=51 // pred_fallthru
          _
      $region52: #{tpu_custom_call.1} parent=5 // pred_fallthru
        _
      %p959 = scmp.le.s32.totalorder 2, %s19
      // Predicated region
      $region69: #{tpu_custom_call.1} parent=5 // pred_check
        %p960 = pneg %p959
      $region70: #{tpu_custom_call.1} parent=5 // pred_check_branch
        %962 = sbr.rel (%p960) target = $region72
      $region71: #{tpu_custom_call.1} parent=5 // pred_region
        %s963 = ssub.s32 %s19, 2
        // Predicated region
        $region73: #{tpu_custom_call.1} parent=71 // pred_check
          %p964 = pneg %p259
        $region74: #{tpu_custom_call.1} parent=71 // pred_check_branch
          %966 = sbr.rel (%p964) target = $region76
        $region75: #{tpu_custom_call.1} parent=71 // pred_region
          %s967 = sand.u32 %s244, 1
          %s968 = scalar_lea.sflag [#allocation3], %s967
          %s969 = sand.u32 %s244, 1
          %s970 = smul.addr %s969, 96
          %s971 = scalar_lea.vmem [#allocation8], %s970
          %972 = dma.done %s968, 1536
        $region76: #{tpu_custom_call.1} parent=71 // pred_fallthru
          _
      $region72: #{tpu_custom_call.1} parent=5 // pred_fallthru
        _
    $region6: #{tpu_custom_call.1} parent=1 // loop_footer
      %s23 = sadd.s32 1, %s19
    $region7: #{tpu_custom_call.1} parent=1 // loop_footer_branch
      %18 = sbr.rel target = $region3
    $region8: #{tpu_custom_call.1} parent=1 // loop_exit
      _
    %973 = vsyncpa [#allocation3], 1
    %s974 = scalar_lea.sflag [#allocation3], 1
    %975 = vsyncpa %s974, 1
    %976 = vsyncpa [#allocation4], 1
    %s977 = scalar_lea.sflag [#allocation4], 1
    %978 = vsyncpa %s977, 1
    %979 = vsyncpa [#allocation6], 1

</llo_original>
